<compile_context>
chip_gen: v7x
topology: tpu7x:2x2x1
jax: 0.10.0
libtpu: 0.0.40
codegen_flags: <defaults>
</compile_context>

<pallas_src>
import jax
import jax.numpy as jnp
from jax import lax
from jax.experimental import pallas as pl
from jax.experimental.pallas import tpu as pltpu


def _round_up(n, m):
    return -(-n // m) * m


def _net_e_kernel(x_ref, y_ref, w1_ref, w2_ref, b12_ref, w3_ref, b3_ref,
                  w4_ref, b4_ref, w5_ref, b5_ref, out_ref):
    # Inputs arrive f32 straight from HBM; cast to bf16 on the VPU so the MXU
    # runs bf16 with f32 accumulation.
    x = x_ref[...].astype(jnp.bfloat16)                        # (TB, in1)
    y = y_ref[...].astype(jnp.bfloat16)                        # (TB, in2)

    # fc1|fc2 fused block-diagonal layer -> (TB, 2*Hp) f32, then ReLU.
    h12 = jnp.dot(x, w1_ref[...], preferred_element_type=jnp.float32)
    h12 = h12 + jnp.dot(y, w2_ref[...], preferred_element_type=jnp.float32)
    h12 = jnp.maximum(h12 + b12_ref[...], 0.0)

    # fc3 + ReLU -> (TB, Hp)
    h3 = jnp.maximum(
        jnp.dot(h12.astype(jnp.bfloat16), w3_ref[...],
                preferred_element_type=jnp.float32) + b3_ref[...], 0.0)

    # fc4 + ReLU -> (TB, Hp)
    h4 = jnp.maximum(
        jnp.dot(h3.astype(jnp.bfloat16), w4_ref[...],
                preferred_element_type=jnp.float32) + b4_ref[...], 0.0)

    # fc5 on the MXU as an NT contraction: (1, Hp) x (TB, Hp)^T -> (1, TB).
    # Result is already a lane-dense row (no cross-lane XLU reduce, no masked
    # column store).
    o = lax.dot_general(w5_ref[...], h4.astype(jnp.bfloat16),
                        (((1,), (1,)), ((), ())),
                        preferred_element_type=jnp.float32)    # (1, TB)
    out_ref[...] = (o + b5_ref[...]).reshape(out_ref.shape)


def _choose_tile_b(batch, tile_b):
    b8 = _round_up(max(batch, 1), 8)
    if b8 <= tile_b:
        # A single tile would cover the whole batch.  For large-ish batches
        # split it in two so a v7x dual-TC "parallel" grid has >= 2 steps
        # (harmless on single-TC v5e/v6e).
        if b8 >= 1024:
            return _round_up(-(-b8 // 2), 8)
        return b8
    return tile_b


def net_e_forward(x, y, kp, tile_b=2048, vmem_limit_bytes=48 * 1024 * 1024):
    """x: [B, in1] f32, y: [B, in2] f32, kp: packed/padded kernel params."""
    B, in1 = x.shape
    _, in2 = y.shape
    hp2 = kp["w1"].shape[1]              # 2 * Hp
    hp = hp2 // 2

    tile_b = _choose_tile_b(B, tile_b)
    grid_b = pl.cdiv(B, tile_b)          # partial last tile handled by Pallas

    def resident(a):                      # grid-invariant -> stays in VMEM
        return pl.BlockSpec(a.shape, lambda i: (0,) * a.ndim)

    in_specs = [
        pl.BlockSpec((tile_b, in1), lambda i: (i, 0)),         # x row tiles
        pl.BlockSpec((tile_b, in2), lambda i: (i, 0)),         # y row tiles
        resident(kp["w1"]), resident(kp["w2"]), resident(kp["b12"]),
        resident(kp["w3"]), resident(kp["b3"]),
        resident(kp["w4"]), resident(kp["b4"]),
        resident(kp["w5"]), resident(kp["b5"]),
    ]
    # Lane-dense output: one (1, tile_b) row per grid step.
    out_spec = pl.BlockSpec((1, 1, tile_b), lambda i: (i, 0, 0))
    out_shape = jax.ShapeDtypeStruct((grid_b, 1, tile_b), jnp.float32)

    flops = 2 * grid_b * tile_b * (
        (in1 + in2) * hp2 + hp2 * hp + hp * hp + hp)
    weight_bytes = sum(int(kp[k].size) * kp[k].dtype.itemsize for k in kp)
    cost = pl.CostEstimate(
        flops=flops, transcendentals=0,
        bytes_accessed=int(x.size + y.size) * 4 + weight_bytes
        + grid_b * tile_b * 4)

    out = pl.pallas_call(
        _net_e_kernel,
        out_shape=out_shape,
        grid=(grid_b,),
        in_specs=in_specs,
        out_specs=out_spec,
        compiler_params=pltpu.CompilerParams(
            dimension_semantics=("parallel",),
            vmem_limit_bytes=vmem_limit_bytes),
        cost_estimate=cost,
    )(x, y, kp["w1"], kp["w2"], kp["b12"], kp["w3"], kp["b3"],
      kp["w4"], kp["b4"], kp["w5"], kp["b5"])
    return out.reshape(grid_b * tile_b, 1)[:B]


def init_params(key, input_size1=32, input_size2=32,
                hidden_size1=100, hidden_size2=100, hidden_size3=100):
    """Mirror the PyTorch init: N(0, 0.02) weights (torch (out, in) layout),
    zero biases. Unpadded f32 — used by the reference and by pack_params."""
    ks = jax.random.split(key, 5)
    std = 0.02

    def w(k, out_f, in_f):
        return std * jax.random.normal(k, (out_f, in_f), jnp.float32)

    return {
        "w1": w(ks[0], hidden_size1, input_size1),
        "b1": jnp.zeros((hidden_size1,), jnp.float32),
        "w2": w(ks[1], hidden_size1, input_size2),
        "b2": jnp.zeros((hidden_size1,), jnp.float32),
        "w3": w(ks[2], hidden_size2, 2 * hidden_size1),
        "b3": jnp.zeros((hidden_size2,), jnp.float32),
        "w4": w(ks[3], hidden_size3, hidden_size2),
        "b4": jnp.zeros((hidden_size3,), jnp.float32),
        "w5": w(ks[4], 1, hidden_size3),
        "b5": jnp.zeros((1,), jnp.float32),
    }


def pack_params(p):
    """Build lane-dense (128-padded), bf16 kernel weights from torch-layout
    f32 params. fc1/fc2 become the two input-row blocks of one block-diagonal
    (in, 2*Hp) layer. Padding is exact: padded activations are ReLU(0)=0 and
    padded weight rows/cols are 0, so they never contribute."""
    h1, in1 = p["w1"].shape
    _, in2 = p["w2"].shape
    h2 = p["w3"].shape[0]
    h3 = p["w4"].shape[0]
    hp = _round_up(max(h1, h2, h3), 128)

    # fc1 -> columns [0, Hp), fc2 -> columns [Hp, 2Hp).
    w1p = jnp.zeros((in1, 2 * hp), jnp.float32).at[:, :h1].set(p["w1"].T)
    w2p = jnp.zeros((in2, 2 * hp), jnp.float32).at[:, hp:hp + h1].set(p["w2"].T)
    b12 = jnp.zeros((1, 2 * hp), jnp.float32)
    b12 = b12.at[0, :h1].set(p["b1"]).at[0, hp:hp + h1].set(p["b2"])

    # fc3: rows 0..h1 act on out1 (cols 0..Hp of h12), rows h1..2h1 on out2.
    w3t = p["w3"].T                                   # (2*h1, h2)
    w3p = jnp.zeros((2 * hp, hp), jnp.float32)
    w3p = w3p.at[:h1, :h2].set(w3t[:h1])
    w3p = w3p.at[hp:hp + h1, :h2].set(w3t[h1:])
    b3p = jnp.zeros((1, hp), jnp.float32).at[0, :h2].set(p["b3"])

    w4p = jnp.zeros((hp, hp), jnp.float32).at[:h2, :h3].set(p["w4"].T)
    b4p = jnp.zeros((1, hp), jnp.float32).at[0, :h3].set(p["b4"])

    w5p = jnp.zeros((1, hp), jnp.float32).at[0, :h3].set(p["w5"][0])
    b5p = p["b5"].reshape(1, 1)

    return {
        "w1": w1p.astype(jnp.bfloat16), "w2": w2p.astype(jnp.bfloat16),
        "b12": b12,
        "w3": w3p.astype(jnp.bfloat16), "b3": b3p,
        "w4": w4p.astype(jnp.bfloat16), "b4": b4p,
        "w5": w5p.astype(jnp.bfloat16), "b5": b5p,
    }


def net_e_reference(x, y, p):
    """Pure-JAX f32 reference matching the PyTorch forward exactly."""
    o1 = jax.nn.relu(x @ p["w1"].T + p["b1"])
    o2 = jax.nn.relu(y @ p["w2"].T + p["b2"])
    h = jnp.concatenate([o1, o2], axis=1)
    h = jax.nn.relu(h @ p["w3"].T + p["b3"])
    h = jax.nn.relu(h @ p["w4"].T + p["b4"])
    return h @ p["w5"].T + p["b5"]


if __name__ == "__main__":
    key = jax.random.PRNGKey(0)
    kx, ky, kp_key = jax.random.split(key, 3)

    B, IN1, IN2 = 8, 32, 32
    x = jax.random.normal(kx, (B, IN1), jnp.float32)
    y = jax.random.normal(ky, (B, IN2), jnp.float32)

    params = init_params(kp_key, input_size1=IN1, input_size2=IN2)
    kernel_params = pack_params(params)

    # Small-batch path (single tile).
    out = jax.block_until_ready(net_e_forward(x, y, kernel_params))
    ref = net_e_reference(x, y, params)
    assert out.shape == (B, 1), out.shape
    # bf16 matmuls vs f32 reference -> loosened tolerance.
    assert jnp.allclose(out, ref, atol=1e-3, rtol=2e-2), "mismatch (small B)"

    # Multi-tile path with a partial last tile (exercises grid > 1, lane-dense
    # row output and OOB-row masking), still small shapes.
    B2 = 300
    kx2, ky2 = jax.random.split(jax.random.PRNGKey(1))
    x2 = jax.random.normal(kx2, (B2, IN1), jnp.float32)
    y2 = jax.random.normal(ky2, (B2, IN2), jnp.float32)
    out2 = jax.block_until_ready(
        net_e_forward(x2, y2, kernel_params, tile_b=128))
    ref2 = net_e_reference(x2, y2, params)
    assert out2.shape == (B2, 1), out2.shape
    assert jnp.allclose(out2, ref2, atol=1e-3, rtol=2e-2), "mismatch (tiled)"

    print("KERNEL_OK")
</pallas_src>

<mosaic_0001>
module attributes {stable_mosaic.version = 11 : i64} {
  func.func @_net_e_kernel(%arg0: i32, %arg1: memref<8x32xf32, #tpu.memory_space<vmem>>, %arg2: memref<8x32xf32, #tpu.memory_space<vmem>>, %arg3: memref<32x256xbf16, #tpu.memory_space<vmem>>, %arg4: memref<32x256xbf16, #tpu.memory_space<vmem>>, %arg5: memref<1x256xf32, #tpu.memory_space<vmem>>, %arg6: memref<256x128xbf16, #tpu.memory_space<vmem>>, %arg7: memref<1x128xf32, #tpu.memory_space<vmem>>, %arg8: memref<128x128xbf16, #tpu.memory_space<vmem>>, %arg9: memref<1x128xf32, #tpu.memory_space<vmem>>, %arg10: memref<1x128xbf16, #tpu.memory_space<vmem>>, %arg11: memref<1x1xf32, #tpu.memory_space<vmem>>, %arg12: memref<1x1x8xf32, #tpu.memory_space<vmem>>) attributes {dimension_semantics = [#tpu.dimension_semantics<parallel>], iteration_bounds = array<i64: 1>, scalar_prefetch = 0 : i64, scratch_operands = 0 : i64, tpu.core_type = #tpu.core_type<tc>, window_params = [{transform_indices = @transform_0, window_bounds = array<i64: 8, 32>}, {transform_indices = @transform_1, window_bounds = array<i64: 8, 32>}, {pipeline_mode = #tpu.pipeline_mode<synchronous>, transform_indices = @transform_2, window_bounds = array<i64: 32, 256>}, {pipeline_mode = #tpu.pipeline_mode<synchronous>, transform_indices = @transform_3, window_bounds = array<i64: 32, 256>}, {pipeline_mode = #tpu.pipeline_mode<synchronous>, transform_indices = @transform_4, window_bounds = array<i64: 1, 256>}, {pipeline_mode = #tpu.pipeline_mode<synchronous>, transform_indices = @transform_5, window_bounds = array<i64: 256, 128>}, {pipeline_mode = #tpu.pipeline_mode<synchronous>, transform_indices = @transform_6, window_bounds = array<i64: 1, 128>}, {pipeline_mode = #tpu.pipeline_mode<synchronous>, transform_indices = @transform_7, window_bounds = array<i64: 128, 128>}, {pipeline_mode = #tpu.pipeline_mode<synchronous>, transform_indices = @transform_8, window_bounds = array<i64: 1, 128>}, {pipeline_mode = #tpu.pipeline_mode<synchronous>, transform_indices = @transform_9, window_bounds = array<i64: 1, 128>}, {pipeline_mode = #tpu.pipeline_mode<synchronous>, transform_indices = @transform_10, window_bounds = array<i64: 1, 1>}, {transform_indices = @transform_11, window_bounds = array<i64: 1, 1, 8>}]} {
    %c0 = arith.constant 0 : index
    %c0_0 = arith.constant 0 : index
    %0 = vector.load %arg1[%c0, %c0_0] : memref<8x32xf32, #tpu.memory_space<vmem>>, vector<8x32xf32>
    %1 = arith.truncf %0 : vector<8x32xf32> to vector<8x32xbf16>
    %c0_1 = arith.constant 0 : index
    %c0_2 = arith.constant 0 : index
    %2 = vector.load %arg2[%c0_1, %c0_2] : memref<8x32xf32, #tpu.memory_space<vmem>>, vector<8x32xf32>
    %3 = arith.truncf %2 : vector<8x32xf32> to vector<8x32xbf16>
    %c0_3 = arith.constant 0 : index
    %c0_4 = arith.constant 0 : index
    %4 = vector.load %arg3[%c0_3, %c0_4] : memref<32x256xbf16, #tpu.memory_space<vmem>>, vector<32x256xbf16>
    %cst = arith.constant dense<0.000000e+00> : vector<8x256xf32>
    %5 = tpu.matmul %1, %4, %cst {dimension_numbers = #tpu.dot_dimension_numbers<[1], [0], [0], [1], [0, 0, 1, 1], [], []>} : vector<8x32xbf16>, vector<32x256xbf16>, vector<8x256xf32> -> vector<8x256xf32>
    %c0_5 = arith.constant 0 : index
    %c0_6 = arith.constant 0 : index
    %6 = vector.load %arg4[%c0_5, %c0_6] : memref<32x256xbf16, #tpu.memory_space<vmem>>, vector<32x256xbf16>
    %cst_7 = arith.constant dense<0.000000e+00> : vector<8x256xf32>
    %7 = tpu.matmul %3, %6, %cst_7 {dimension_numbers = #tpu.dot_dimension_numbers<[1], [0], [0], [1], [0, 0, 1, 1], [], []>} : vector<8x32xbf16>, vector<32x256xbf16>, vector<8x256xf32> -> vector<8x256xf32>
    %8 = arith.addf %5, %7 : vector<8x256xf32>
    %c0_8 = arith.constant 0 : index
    %c0_9 = arith.constant 0 : index
    %9 = vector.load %arg5[%c0_8, %c0_9] : memref<1x256xf32, #tpu.memory_space<vmem>>, vector<1x256xf32>
    %10 = vector.broadcast %9 : vector<1x256xf32> to vector<8x256xf32>
    %11 = arith.addf %8, %10 : vector<8x256xf32>
    %cst_10 = arith.constant 0.000000e+00 : f32
    %12 = vector.broadcast %cst_10 : f32 to vector<8x256xf32>
    %13 = arith.maximumf %11, %12 : vector<8x256xf32>
    %14 = arith.truncf %13 : vector<8x256xf32> to vector<8x256xbf16>
    %c0_11 = arith.constant 0 : index
    %c0_12 = arith.constant 0 : index
    %15 = vector.load %arg6[%c0_11, %c0_12] : memref<256x128xbf16, #tpu.memory_space<vmem>>, vector<256x128xbf16>
    %cst_13 = arith.constant dense<0.000000e+00> : vector<8x128xf32>
    %16 = tpu.matmul %14, %15, %cst_13 {dimension_numbers = #tpu.dot_dimension_numbers<[1], [0], [0], [1], [0, 0, 1, 1], [], []>} : vector<8x256xbf16>, vector<256x128xbf16>, vector<8x128xf32> -> vector<8x128xf32>
    %c0_14 = arith.constant 0 : index
    %c0_15 = arith.constant 0 : index
    %17 = vector.load %arg7[%c0_14, %c0_15] : memref<1x128xf32, #tpu.memory_space<vmem>>, vector<1x128xf32>
    %18 = vector.broadcast %17 : vector<1x128xf32> to vector<8x128xf32>
    %19 = arith.addf %16, %18 : vector<8x128xf32>
    %cst_16 = arith.constant 0.000000e+00 : f32
    %20 = vector.broadcast %cst_16 : f32 to vector<8x128xf32>
    %21 = arith.maximumf %19, %20 : vector<8x128xf32>
    %22 = arith.truncf %21 : vector<8x128xf32> to vector<8x128xbf16>
    %c0_17 = arith.constant 0 : index
    %c0_18 = arith.constant 0 : index
    %23 = vector.load %arg8[%c0_17, %c0_18] : memref<128x128xbf16, #tpu.memory_space<vmem>>, vector<128x128xbf16>
    %cst_19 = arith.constant dense<0.000000e+00> : vector<8x128xf32>
    %24 = tpu.matmul %22, %23, %cst_19 {dimension_numbers = #tpu.dot_dimension_numbers<[1], [0], [0], [1], [0, 0, 1, 1], [], []>} : vector<8x128xbf16>, vector<128x128xbf16>, vector<8x128xf32> -> vector<8x128xf32>
    %c0_20 = arith.constant 0 : index
    %c0_21 = arith.constant 0 : index
    %25 = vector.load %arg9[%c0_20, %c0_21] : memref<1x128xf32, #tpu.memory_space<vmem>>, vector<1x128xf32>
    %26 = vector.broadcast %25 : vector<1x128xf32> to vector<8x128xf32>
    %27 = arith.addf %24, %26 : vector<8x128xf32>
    %cst_22 = arith.constant 0.000000e+00 : f32
    %28 = vector.broadcast %cst_22 : f32 to vector<8x128xf32>
    %29 = arith.maximumf %27, %28 : vector<8x128xf32>
    %c0_23 = arith.constant 0 : index
    %c0_24 = arith.constant 0 : index
    %30 = vector.load %arg10[%c0_23, %c0_24] : memref<1x128xbf16, #tpu.memory_space<vmem>>, vector<1x128xbf16>
    %31 = arith.truncf %29 : vector<8x128xf32> to vector<8x128xbf16>
    %cst_25 = arith.constant dense<0.000000e+00> : vector<1x8xf32>
    %32 = tpu.matmul %30, %31, %cst_25 {dimension_numbers = #tpu.dot_dimension_numbers<[1], [1], [0], [0], [0, 0, 1, 0], [], []>} : vector<1x128xbf16>, vector<8x128xbf16>, vector<1x8xf32> -> vector<1x8xf32>
    %c0_26 = arith.constant 0 : index
    %c0_27 = arith.constant 0 : index
    %33 = vector.load %arg11[%c0_26, %c0_27] : memref<1x1xf32, #tpu.memory_space<vmem>>, vector<1x1xf32>
    %34 = vector.broadcast %33 : vector<1x1xf32> to vector<1x8xf32>
    %35 = arith.addf %32, %34 : vector<1x8xf32>
    %36 = vector.shape_cast %35 : vector<1x8xf32> to vector<1x1x8xf32>
    %c0_28 = arith.constant 0 : index
    %c0_29 = arith.constant 0 : index
    %c0_30 = arith.constant 0 : index
    %37 = vector.load %arg12[%c0_28, %c0_29, %c0_30] : memref<1x1x8xf32, #tpu.memory_space<vmem>>, vector<1x1x8xf32>
    tpu.vector_store %arg12[%c0_28, %c0_29, %c0_30], %36 {strides = array<i32>} : memref<1x1x8xf32, #tpu.memory_space<vmem>>, vector<1x1x8xf32>,
    return
  }
  func.func @transform_0(%arg0: i32) -> (i32, i32) {
    %c0_i32 = arith.constant 0 : i32
    %c0_i32_0 = arith.constant 0 : i32
    return %arg0, %c0_i32 : i32, i32
  }
  func.func @transform_1(%arg0: i32) -> (i32, i32) {
    %c0_i32 = arith.constant 0 : i32
    %c0_i32_0 = arith.constant 0 : i32
    return %arg0, %c0_i32 : i32, i32
  }
  func.func @transform_2(%arg0: i32) -> (i32, i32) {
    %c0_i32 = arith.constant 0 : i32
    %c0_i32_0 = arith.constant 0 : i32
    %c0_i32_1 = arith.constant 0 : i32
    return %c0_i32, %c0_i32_0 : i32, i32
  }
  func.func @transform_3(%arg0: i32) -> (i32, i32) {
    %c0_i32 = arith.constant 0 : i32
    %c0_i32_0 = arith.constant 0 : i32
    %c0_i32_1 = arith.constant 0 : i32
    return %c0_i32, %c0_i32_0 : i32, i32
  }
  func.func @transform_4(%arg0: i32) -> (i32, i32) {
    %c0_i32 = arith.constant 0 : i32
    %c0_i32_0 = arith.constant 0 : i32
    %c0_i32_1 = arith.constant 0 : i32
    return %c0_i32, %c0_i32_0 : i32, i32
  }
  func.func @transform_5(%arg0: i32) -> (i32, i32) {
    %c0_i32 = arith.constant 0 : i32
    %c0_i32_0 = arith.constant 0 : i32
    %c0_i32_1 = arith.constant 0 : i32
    return %c0_i32, %c0_i32_0 : i32, i32
  }
  func.func @transform_6(%arg0: i32) -> (i32, i32) {
    %c0_i32 = arith.constant 0 : i32
    %c0_i32_0 = arith.constant 0 : i32
    %c0_i32_1 = arith.constant 0 : i32
    return %c0_i32, %c0_i32_0 : i32, i32
  }
  func.func @transform_7(%arg0: i32) -> (i32, i32) {
    %c0_i32 = arith.constant 0 : i32
    %c0_i32_0 = arith.constant 0 : i32
    %c0_i32_1 = arith.constant 0 : i32
    return %c0_i32, %c0_i32_0 : i32, i32
  }
  func.func @transform_8(%arg0: i32) -> (i32, i32) {
    %c0_i32 = arith.constant 0 : i32
    %c0_i32_0 = arith.constant 0 : i32
    %c0_i32_1 = arith.constant 0 : i32
    return %c0_i32, %c0_i32_0 : i32, i32
  }
  func.func @transform_9(%arg0: i32) -> (i32, i32) {
    %c0_i32 = arith.constant 0 : i32
    %c0_i32_0 = arith.constant 0 : i32
    %c0_i32_1 = arith.constant 0 : i32
    return %c0_i32, %c0_i32_0 : i32, i32
  }
  func.func @transform_10(%arg0: i32) -> (i32, i32) {
    %c0_i32 = arith.constant 0 : i32
    %c0_i32_0 = arith.constant 0 : i32
    %c0_i32_1 = arith.constant 0 : i32
    return %c0_i32, %c0_i32_0 : i32, i32
  }
  func.func @transform_11(%arg0: i32) -> (i32, i32, i32) {
    %c0_i32 = arith.constant 0 : i32
    %c0_i32_0 = arith.constant 0 : i32
    %c0_i32_1 = arith.constant 0 : i32
    return %arg0, %c0_i32, %c0_i32_0 : i32, i32, i32
  }
}

</mosaic_0001>

<llo_original>
// kernel: tpu_custom_call.1
$region0: #{tpu_custom_call.1}
  #allocation0 [shape = 'u32[]', space=smem, size = 0x4, offset = 0x4, fixed_abs, tag = 'smem constant byte address 0x4 - core index']
  #allocation1 [shape = 'u32[144,128]{1,0:T(1,128)}', space=vmem, size = 0x12000, scoped, tag = 'internal scratch']
  #allocation2 [shape = 'f32[1,1]{1,0:T(1,128)S(1)}', space=vmem, size = 0x200, scoped, tag = 'scoped memory for tpu_custom_call.1']
  %s0 = inlined_call_operand.hbm [shape: f32[8,32], index: 0, kind: input, shape index: {}]
  %s1 = inlined_call_operand.hbm [shape: f32[8,32], index: 1, kind: input, shape index: {}]
  %s2 = inlined_call_operand.hbm [shape: bf16[32,256], index: 2, kind: input, shape index: {}]
  %s3 = inlined_call_operand.hbm [shape: bf16[32,256], index: 3, kind: input, shape index: {}]
  %s4 = inlined_call_operand.vmem [shape: f32[1,256], index: 4, kind: input, shape index: {}]
  %s5 = inlined_call_operand.hbm [shape: bf16[256,128], index: 5, kind: input, shape index: {}]
  %s6 = inlined_call_operand.vmem [shape: f32[1,128], index: 6, kind: input, shape index: {}]
  %s7 = inlined_call_operand.hbm [shape: bf16[128,128], index: 7, kind: input, shape index: {}]
  %s8 = inlined_call_operand.vmem [shape: f32[1,128], index: 8, kind: input, shape index: {}]
  %s9 = inlined_call_operand.vmem [shape: bf16[1,128], index: 9, kind: input, shape index: {}]
  %s10 = inlined_call_operand.<no memory space> [shape: f32[1,1], index: 10, kind: input, shape index: {}]
  %s11 = inlined_call_operand.hbm [shape: f32[1,1,8], index: 11, kind: output, shape index: {}]
  %s12 = sld [smem:[#allocation0]]
  $region78: #{tpu_custom_call.1} parent=0
    _
  %s14 = ssub.s32 1, %s12
  %s15 = scalar_select 0, %s14, %s12
  %v16 = vstv %s10
  %17 = vst [vmem:[#allocation2] sm:$0x1] %v16
  $region1: #{tpu_custom_call.1} parent=0
    #allocation3 [shape = 'u8[4096]{0}', space=vmem, size = 0x1000, scoped, tag = 'input window, operand 0, single buffered']
    #allocation4 [shape = 's32[1]{0}', space=sflag, size = 0x4, scoped, tag = 'scoped memory for tpu_custom_call.1']
    #allocation5 [shape = 's32[1]{0}', space=sflag, size = 0x4, scoped, tag = 'scoped memory for tpu_custom_call.1']
    #allocation6 [shape = 'u8[4096]{0}', space=vmem, size = 0x1000, scoped, tag = 'input window, operand 1, single buffered']
    #allocation7 [shape = 's32[1]{0}', space=sflag, size = 0x4, scoped, tag = 'scoped memory for tpu_custom_call.1']
    #allocation8 [shape = 'u8[16384]{0}', space=vmem, size = 0x4000, scoped, tag = 'input window, operand 2, single buffered']
    #allocation9 [shape = 'u8[16384]{0}', space=vmem, size = 0x4000, scoped, tag = 'input window, operand 3, single buffered']
    #allocation10 [shape = 's32[1]{0}', space=sflag, size = 0x4, scoped, tag = 'scoped memory for tpu_custom_call.1']
    #allocation11 [shape = 'u8[65536]{0}', space=vmem, size = 0x10000, scoped, tag = 'input window, operand 5, single buffered']
    #allocation12 [shape = 'u8[32768]{0}', space=vmem, size = 0x8000, scoped, tag = 'input window, operand 7, single buffered']
    #allocation13 [shape = 's32[1]{0}', space=sflag, size = 0x4, scoped, tag = 'scoped memory for tpu_custom_call.1']
    #allocation14 [shape = 'u8[512]{0}', space=vmem, size = 0x400, scoped, tag = 'output window, operand 0, single buffered']
    %18 = vsyncpa [#allocation4], 0
    %19 = vsyncpa [#allocation7], 0
    %20 = vsyncpa [#allocation10], 0
    %21 = vsyncpa [#allocation13], 0
    %22 = vsyncpa [#allocation5], 0
    // Predicated region
    $region2: #{tpu_custom_call.1} parent=1 // pred_check
      _
    $region3: #{tpu_custom_call.1} parent=1 // pred_check_branch
      %24 = sbr.rel (0) target = $region5
    $region4: #{tpu_custom_call.1} parent=1 // pred_region
      %s26 = ssub.s32 128, 128
      %27 = vsyncadd [#allocation4], %s26
      %s29 = sshll.u32 [#allocation3], 4
      %s30 = int_to_ptr.vmem [resolvable:$true] %s29
      %32 = dma.hbm_to_vmem [thread:$0]  %s0, 128, %s30, [#allocation4]
    $region5: #{tpu_custom_call.1} parent=1 // pred_fallthru
      _
    // Predicated region
    $region6: #{tpu_custom_call.1} parent=1 // pred_check
      _
    $region7: #{tpu_custom_call.1} parent=1 // pred_check_branch
      %34 = sbr.rel (0) target = $region9
    $region8: #{tpu_custom_call.1} parent=1 // pred_region
      %s36 = ssub.s32 128, 128
      %37 = vsyncadd [#allocation7], %s36
      %s39 = sshll.u32 [#allocation6], 4
      %s40 = int_to_ptr.vmem [resolvable:$true] %s39
      %42 = dma.hbm_to_vmem [thread:$0]  %s1, 128, %s40, [#allocation7]
    $region9: #{tpu_custom_call.1} parent=1 // pred_fallthru
      _
    // Predicated region
    $region10: #{tpu_custom_call.1} parent=1 // pred_check
      _
    $region11: #{tpu_custom_call.1} parent=1 // pred_check_branch
      %44 = sbr.rel (0) target = $region13
    $region12: #{tpu_custom_call.1} parent=1 // pred_region
      %s46 = ssub.s32 512, 512
      %47 = vsyncadd [#allocation7], %s46
      %s48 = sshll.u32 [#allocation8], 4
      %s49 = int_to_ptr.vmem [resolvable:$true] %s48
      %54 = dma.hbm_to_vmem [thread:$0]  %s2, 512, %s49, [#allocation7], 128, 128, 8
    $region13: #{tpu_custom_call.1} parent=1 // pred_fallthru
      _
    // Predicated region
    $region14: #{tpu_custom_call.1} parent=1 // pred_check
      _
    $region15: #{tpu_custom_call.1} parent=1 // pred_check_branch
      %56 = sbr.rel (0) target = $region17
    $region16: #{tpu_custom_call.1} parent=1 // pred_region
      %s58 = ssub.s32 512, 512
      %59 = vsyncadd [#allocation10], %s58
      %s60 = sshll.u32 [#allocation9], 4
      %s61 = int_to_ptr.vmem [resolvable:$true] %s60
      %66 = dma.hbm_to_vmem [thread:$0]  %s3, 512, %s61, [#allocation10], 128, 128, 8
    $region17: #{tpu_custom_call.1} parent=1 // pred_fallthru
      _
    // Predicated region
    $region18: #{tpu_custom_call.1} parent=1 // pred_check
      _
    $region19: #{tpu_custom_call.1} parent=1 // pred_check_branch
      %68 = sbr.rel (0) target = $region21
    $region20: #{tpu_custom_call.1} parent=1 // pred_region
      _
    $region21: #{tpu_custom_call.1} parent=1 // pred_fallthru
      _
    // Predicated region
    $region22: #{tpu_custom_call.1} parent=1 // pred_check
      _
    $region23: #{tpu_custom_call.1} parent=1 // pred_check_branch
      %70 = sbr.rel (0) target = $region25
    $region24: #{tpu_custom_call.1} parent=1 // pred_region
      %s72 = ssub.s32 2048, 2048
      %73 = vsyncadd [#allocation10], %s72
      %s74 = sshll.u32 [#allocation11], 4
      %s75 = int_to_ptr.vmem [resolvable:$true] %s74
      %80 = dma.hbm_to_vmem [thread:$0]  %s5, 2048, %s75, [#allocation10], 64, 64, 4
    $region25: #{tpu_custom_call.1} parent=1 // pred_fallthru
      _
    // Predicated region
    $region26: #{tpu_custom_call.1} parent=1 // pred_check
      _
    $region27: #{tpu_custom_call.1} parent=1 // pred_check_branch
      %82 = sbr.rel (0) target = $region29
    $region28: #{tpu_custom_call.1} parent=1 // pred_region
      _
    $region29: #{tpu_custom_call.1} parent=1 // pred_fallthru
      _
    // Predicated region
    $region30: #{tpu_custom_call.1} parent=1 // pred_check
      _
    $region31: #{tpu_custom_call.1} parent=1 // pred_check_branch
      %84 = sbr.rel (0) target = $region33
    $region32: #{tpu_custom_call.1} parent=1 // pred_region
      %s86 = ssub.s32 1024, 1024
      %87 = vsyncadd [#allocation13], %s86
      %s88 = sshll.u32 [#allocation12], 4
      %s89 = int_to_ptr.vmem [resolvable:$true] %s88
      %94 = dma.hbm_to_vmem [thread:$0]  %s7, 1024, %s89, [#allocation13], 64, 64, 4
    $region33: #{tpu_custom_call.1} parent=1 // pred_fallthru
      _
    // Predicated region
    $region34: #{tpu_custom_call.1} parent=1 // pred_check
      _
    $region35: #{tpu_custom_call.1} parent=1 // pred_check_branch
      %96 = sbr.rel (0) target = $region37
    $region36: #{tpu_custom_call.1} parent=1 // pred_region
      _
    $region37: #{tpu_custom_call.1} parent=1 // pred_fallthru
      _
    // Predicated region
    $region38: #{tpu_custom_call.1} parent=1 // pred_check
      _
    $region39: #{tpu_custom_call.1} parent=1 // pred_check_branch
      %98 = sbr.rel (0) target = $region41
    $region40: #{tpu_custom_call.1} parent=1 // pred_region
      _
    $region41: #{tpu_custom_call.1} parent=1 // pred_fallthru
      _
    // Predicated region
    $region42: #{tpu_custom_call.1} parent=1 // pred_check
      _
    $region43: #{tpu_custom_call.1} parent=1 // pred_check_branch
      %100 = sbr.rel (0) target = $region45
    $region44: #{tpu_custom_call.1} parent=1 // pred_region
      _
    $region45: #{tpu_custom_call.1} parent=1 // pred_fallthru
      _
    // Predicated region
    $region46: #{tpu_custom_call.1} parent=1 // pred_check
      _
    $region47: #{tpu_custom_call.1} parent=1 // pred_check_branch
      %102 = sbr.rel (0) target = $region49
    $region48: #{tpu_custom_call.1} parent=1 // pred_region
      %103 = dma.done [#allocation4], 128
    $region49: #{tpu_custom_call.1} parent=1 // pred_fallthru
      _
    // Predicated region
    $region50: #{tpu_custom_call.1} parent=1 // pred_check
      _
    $region51: #{tpu_custom_call.1} parent=1 // pred_check_branch
      %105 = sbr.rel (0) target = $region53
    $region52: #{tpu_custom_call.1} parent=1 // pred_region
      %106 = dma.done [#allocation7], 128
    $region53: #{tpu_custom_call.1} parent=1 // pred_fallthru
      _
    // Predicated region
    $region54: #{tpu_custom_call.1} parent=1 // pred_check
      _
    $region55: #{tpu_custom_call.1} parent=1 // pred_check_branch
      %108 = sbr.rel (0) target = $region57
    $region56: #{tpu_custom_call.1} parent=1 // pred_region
      %109 = dma.done [#allocation7], 512
    $region57: #{tpu_custom_call.1} parent=1 // pred_fallthru
      _
    // Predicated region
    $region58: #{tpu_custom_call.1} parent=1 // pred_check
      _
    $region59: #{tpu_custom_call.1} parent=1 // pred_check_branch
      %111 = sbr.rel (0) target = $region61
    $region60: #{tpu_custom_call.1} parent=1 // pred_region
      %112 = dma.done [#allocation10], 512
    $region61: #{tpu_custom_call.1} parent=1 // pred_fallthru
      _
    // Predicated region
    $region62: #{tpu_custom_call.1} parent=1 // pred_check
      _
    $region63: #{tpu_custom_call.1} parent=1 // pred_check_branch
      %114 = sbr.rel (0) target = $region65
    $region64: #{tpu_custom_call.1} parent=1 // pred_region
      %115 = dma.done [#allocation10], 2048
    $region65: #{tpu_custom_call.1} parent=1 // pred_fallthru
      _
    // Predicated region
    $region66: #{tpu_custom_call.1} parent=1 // pred_check
      _
    $region67: #{tpu_custom_call.1} parent=1 // pred_check_branch
      %117 = sbr.rel (0) target = $region69
    $region68: #{tpu_custom_call.1} parent=1 // pred_region
      %118 = dma.done [#allocation13], 1024
    $region69: #{tpu_custom_call.1} parent=1 // pred_fallthru
      _
    %v120 = vld [vmem:[#allocation3] sm:$0xff]
    %v121 = vpack.c.bf16 %v120, %v120
    %v122 = vld [vmem:[#allocation6] sm:$0xff]
    %v123 = vpack.c.bf16 %v122, %v122
    %v124 = vld [vmem:[#allocation8] sm:$0xff]
    %v125 = vld [vmem:[#allocation8 + $0x8] sm:$0xff]
    %v126 = vld [vmem:[#allocation8 + $0x10] sm:$0xff]
    %v127 = vld [vmem:[#allocation8 + $0x18] sm:$0xff]
    %v128 = vld [vmem:[#allocation9] sm:$0xff]
    %v129 = vld [vmem:[#allocation9 + $0x8] sm:$0xff]
    %v130 = vld [vmem:[#allocation9 + $0x10] sm:$0xff]
    %v131 = vld [vmem:[#allocation9 + $0x18] sm:$0xff]
    %v136 = vunpack.c.l.b16 %v128
    %v137 = vunpack.c.h.b16 %v128
    %v138 = vunpack.c.l.b16 %v129
    %v139 = vunpack.c.h.b16 %v129
    %v140 = vunpack.c.l.b16 %v130
    %v141 = vunpack.c.h.b16 %v130
    %v142 = vunpack.c.l.b16 %v131
    %v143 = vunpack.c.h.b16 %v131
    %v144 = vpack.c.b16 %v138, %v136
    %v145 = vpack.c.b16 %v139, %v137
    %v146 = vpack.c.b16 %v142, %v140
    %v147 = vpack.c.b16 %v143, %v141
    %vm152 = vcmask 261120
    %v154 = vsel %vm152, %v123, 0
    %156 = vmatprep.subr.bf16.mxu0 %v145
    %157 = vmatpush1.bf16.msra.mxu0 %v144
    %158 = vmatprep.subr.bf16.mxu0 %v147
    %159 = vmatpush1.bf16.msra.mxu0 %v146
    %160 = vmatprep.subr.bf16.mxu0 0
    %161 = vmatpush1.bf16.msra.mxu0 0
    %162 = vmatprep.subr.bf16.mxu0 0
    %163 = vmatpush1.bf16.msra.mxu0 0
    %164 = vmatprep.subr.bf16.mxu0 0
    %165 = vmatpush1.bf16.msra.mxu0 0
    %166 = vmatprep.subr.bf16.mxu0 0
    %167 = vmatpush1.bf16.msra.mxu0 0
    %168 = vmatprep.subr.bf16.mxu0 0
    %169 = vmatpush1.bf16.msra.mxu0 0
    %170 = vmatprep.subr.bf16.mxu0 0
    %171 = vmatpush1.bf16.msra.mxu0 0
    %172 = vmatprep.subr.bf16.mxu0 0
    %173 = vmatpush1.bf16.msra.mxu0 0
    %174 = vmatprep.subr.bf16.mxu0 0
    %175 = vmatpush1.bf16.msra.mxu0 0
    %176 = vmatprep.subr.bf16.mxu0 0
    %177 = vmatpush1.bf16.msra.mxu0 0
    %178 = vmatprep.subr.bf16.mxu0 0
    %179 = vmatpush1.bf16.msra.mxu0 0
    %180 = vmatprep.subr.bf16.mxu0 0
    %181 = vmatpush1.bf16.msra.mxu0 0
    %182 = vmatprep.subr.bf16.mxu0 0
    %183 = vmatpush1.bf16.msra.mxu0 0
    %184 = vmatprep.subr.bf16.mxu0 0
    %185 = vmatpush1.bf16.msra.mxu0 0
    %186 = vmatprep.subr.bf16.mxu0 0
    %187 = vmatpush1.bf16.msra.mxu0 0
    %188 = vmatprep.mubr.bf16.mxu0 0
    %189 = vmatmul.mubr.bf16.gmra.mrb[0].mxu0 %v154
    %v190 = vpop.f32.mrb[0].mxu0
    %v191 = vadd.f32 0.0, %v190
    %v192 = vpop.f32.mrb[0].mxu0
    %v193 = vadd.f32 0.0, %v192
    %v194 = vpop.f32.mrb[0].mxu0
    %v195 = vpop.f32.mrb[0].mxu0
    %196 = vdwg.mxu0
    %v201 = vunpack.c.l.b16 %v124
    %v202 = vunpack.c.h.b16 %v124
    %v203 = vunpack.c.l.b16 %v125
    %v204 = vunpack.c.h.b16 %v125
    %v205 = vunpack.c.l.b16 %v126
    %v206 = vunpack.c.h.b16 %v126
    %v207 = vunpack.c.l.b16 %v127
    %v208 = vunpack.c.h.b16 %v127
    %v209 = vpack.c.b16 %v203, %v201
    %v210 = vpack.c.b16 %v204, %v202
    %v211 = vpack.c.b16 %v207, %v205
    %v212 = vpack.c.b16 %v208, %v206
    %v218 = vsel %vm152, %v121, 0
    %220 = vmatprep.subr.bf16.mxu0 %v210
    %221 = vmatpush1.bf16.msra.mxu0 %v209
    %222 = vmatprep.subr.bf16.mxu0 %v212
    %223 = vmatpush1.bf16.msra.mxu0 %v211
    %224 = vmatprep.subr.bf16.mxu0 0
    %225 = vmatpush1.bf16.msra.mxu0 0
    %226 = vmatprep.subr.bf16.mxu0 0
    %227 = vmatpush1.bf16.msra.mxu0 0
    %228 = vmatprep.subr.bf16.mxu0 0
    %229 = vmatpush1.bf16.msra.mxu0 0
    %230 = vmatprep.subr.bf16.mxu0 0
    %231 = vmatpush1.bf16.msra.mxu0 0
    %232 = vmatprep.subr.bf16.mxu0 0
    %233 = vmatpush1.bf16.msra.mxu0 0
    %234 = vmatprep.subr.bf16.mxu0 0
    %235 = vmatpush1.bf16.msra.mxu0 0
    %236 = vmatprep.subr.bf16.mxu0 0
    %237 = vmatpush1.bf16.msra.mxu0 0
    %238 = vmatprep.subr.bf16.mxu0 0
    %239 = vmatpush1.bf16.msra.mxu0 0
    %240 = vmatprep.subr.bf16.mxu0 0
    %241 = vmatpush1.bf16.msra.mxu0 0
    %242 = vmatprep.subr.bf16.mxu0 0
    %243 = vmatpush1.bf16.msra.mxu0 0
    %244 = vmatprep.subr.bf16.mxu0 0
    %245 = vmatpush1.bf16.msra.mxu0 0
    %246 = vmatprep.subr.bf16.mxu0 0
    %247 = vmatpush1.bf16.msra.mxu0 0
    %248 = vmatprep.subr.bf16.mxu0 0
    %249 = vmatpush1.bf16.msra.mxu0 0
    %250 = vmatprep.subr.bf16.mxu0 0
    %251 = vmatpush1.bf16.msra.mxu0 0
    %252 = vmatprep.mubr.bf16.mxu0 0
    %253 = vmatmul.mubr.bf16.gmra.mrb[0].mxu0 %v218
    %v254 = vpop.f32.mrb[0].mxu0
    %v255 = vadd.f32 %v191, %v254
    %v256 = vpop.f32.mrb[0].mxu0
    %v257 = vadd.f32 %v193, %v256
    %v258 = vpop.f32.mrb[0].mxu0
    %v259 = vpop.f32.mrb[0].mxu0
    %260 = vdwg.mxu0
    %v261 = vld [vmem:[%s4] sm:$0x3]
    %v263 = vlaneseq
    %v264 = vshrl.u32 %v263, 7
    %v265 = vsub.s32 0, %v264
    %v266 = vrot.slane %v261, %v265
    %v267 = vlaneseq
    %v268 = vshrl.u32 %v267, 7
    %v269 = vsub.s32 1, %v268
    %v270 = vrot.slane %v261, %v269
    %v273 = vadd.f32 %v255, %v266
    %v274 = vadd.f32 %v257, %v270
    %v275 = vmax.f32 %v273, 0.0
    %v276 = vmax.f32 %v274, 0.0
    %v277 = vpack.c.bf16 %v275, %v275
    %v278 = vpack.c.bf16 %v276, %v276
    %v279 = vld [vmem:[#allocation11] sm:$0xf]
    %v280 = vld [vmem:[#allocation11 + $0x4] sm:$0xf]
    %v281 = vld [vmem:[#allocation11 + $0x8] sm:$0xf]
    %v282 = vld [vmem:[#allocation11 + $0xc] sm:$0xf]
    %v283 = vld [vmem:[#allocation11 + $0x10] sm:$0xf]
    %v284 = vld [vmem:[#allocation11 + $0x14] sm:$0xf]
    %v285 = vld [vmem:[#allocation11 + $0x18] sm:$0xf]
    %v286 = vld [vmem:[#allocation11 + $0x1c] sm:$0xf]
    %v287 = vld [vmem:[#allocation11 + $0x20] sm:$0xf]
    %v288 = vld [vmem:[#allocation11 + $0x24] sm:$0xf]
    %v289 = vld [vmem:[#allocation11 + $0x28] sm:$0xf]
    %v290 = vld [vmem:[#allocation11 + $0x2c] sm:$0xf]
    %v291 = vld [vmem:[#allocation11 + $0x30] sm:$0xf]
    %v292 = vld [vmem:[#allocation11 + $0x34] sm:$0xf]
    %v293 = vld [vmem:[#allocation11 + $0x38] sm:$0xf]
    %v294 = vld [vmem:[#allocation11 + $0x3c] sm:$0xf]
    %v295 = vld [vmem:[#allocation11 + $0x40] sm:$0xf]
    %v296 = vld [vmem:[#allocation11 + $0x44] sm:$0xf]
    %v297 = vld [vmem:[#allocation11 + $0x48] sm:$0xf]
    %v298 = vld [vmem:[#allocation11 + $0x4c] sm:$0xf]
    %v299 = vld [vmem:[#allocation11 + $0x50] sm:$0xf]
    %v300 = vld [vmem:[#allocation11 + $0x54] sm:$0xf]
    %v301 = vld [vmem:[#allocation11 + $0x58] sm:$0xf]
    %v302 = vld [vmem:[#allocation11 + $0x5c] sm:$0xf]
    %v303 = vld [vmem:[#allocation11 + $0x60] sm:$0xf]
    %v304 = vld [vmem:[#allocation11 + $0x64] sm:$0xf]
    %v305 = vld [vmem:[#allocation11 + $0x68] sm:$0xf]
    %v306 = vld [vmem:[#allocation11 + $0x6c] sm:$0xf]
    %v307 = vld [vmem:[#allocation11 + $0x70] sm:$0xf]
    %v308 = vld [vmem:[#allocation11 + $0x74] sm:$0xf]
    %v309 = vld [vmem:[#allocation11 + $0x78] sm:$0xf]
    %v310 = vld [vmem:[#allocation11 + $0x7c] sm:$0xf]
    %v311 = vld [vmem:[%s6] sm:$0x1]
    %v313 = vlaneseq
    %v314 = vshrl.u32 %v313, 7
    %v315 = vsub.s32 0, %v314
    %v316 = vrot.slane %v311, %v315
    %v350 = vunpack.c.l.b16 %v279
    %v351 = vunpack.c.l.b16 %v280
    %v352 = vunpack.c.l.b16 %v281
    %v353 = vunpack.c.l.b16 %v282
    %v354 = vunpack.c.l.b16 %v283
    %v355 = vunpack.c.l.b16 %v284
    %v356 = vunpack.c.l.b16 %v285
    %v357 = vunpack.c.l.b16 %v286
    %v358 = vunpack.c.l.b16 %v287
    %v359 = vunpack.c.l.b16 %v288
    %v360 = vunpack.c.l.b16 %v289
    %v361 = vunpack.c.l.b16 %v290
    %v362 = vunpack.c.l.b16 %v291
    %v363 = vunpack.c.l.b16 %v292
    %v364 = vunpack.c.l.b16 %v293
    %v365 = vunpack.c.l.b16 %v294
    %v366 = vunpack.c.l.b16 %v295
    %v367 = vunpack.c.l.b16 %v296
    %v368 = vunpack.c.l.b16 %v297
    %v369 = vunpack.c.l.b16 %v298
    %v370 = vunpack.c.l.b16 %v299
    %v371 = vunpack.c.l.b16 %v300
    %v372 = vunpack.c.l.b16 %v301
    %v373 = vunpack.c.l.b16 %v302
    %v374 = vunpack.c.l.b16 %v303
    %v375 = vunpack.c.l.b16 %v304
    %v376 = vunpack.c.l.b16 %v305
    %v377 = vunpack.c.l.b16 %v306
    %v378 = vunpack.c.l.b16 %v307
    %v379 = vunpack.c.l.b16 %v308
    %v380 = vunpack.c.l.b16 %v309
    %v381 = vunpack.c.l.b16 %v310
    %v382 = vpack.c.b16 %v351, %v350
    %v383 = vpack.c.b16 %v353, %v352
    %v384 = vpack.c.b16 %v355, %v354
    %v385 = vpack.c.b16 %v357, %v356
    %v386 = vpack.c.b16 %v359, %v358
    %v387 = vpack.c.b16 %v361, %v360
    %v388 = vpack.c.b16 %v363, %v362
    %v389 = vpack.c.b16 %v365, %v364
    %v390 = vpack.c.b16 %v367, %v366
    %v391 = vpack.c.b16 %v369, %v368
    %v392 = vpack.c.b16 %v371, %v370
    %v393 = vpack.c.b16 %v373, %v372
    %v394 = vpack.c.b16 %v375, %v374
    %v395 = vpack.c.b16 %v377, %v376
    %v396 = vpack.c.b16 %v379, %v378
    %v397 = vpack.c.b16 %v381, %v380
    %414 = vmatprep.subr.bf16.mxu0 0
    %415 = vmatpush1.bf16.msra.mxu0 %v382
    %416 = vmatprep.subr.bf16.mxu0 0
    %417 = vmatpush1.bf16.msra.mxu0 %v383
    %418 = vmatprep.subr.bf16.mxu0 0
    %419 = vmatpush1.bf16.msra.mxu0 %v384
    %420 = vmatprep.subr.bf16.mxu0 0
    %421 = vmatpush1.bf16.msra.mxu0 %v385
    %422 = vmatprep.subr.bf16.mxu0 0
    %423 = vmatpush1.bf16.msra.mxu0 %v386
    %424 = vmatprep.subr.bf16.mxu0 0
    %425 = vmatpush1.bf16.msra.mxu0 %v387
    %426 = vmatprep.subr.bf16.mxu0 0
    %427 = vmatpush1.bf16.msra.mxu0 %v388
    %428 = vmatprep.subr.bf16.mxu0 0
    %429 = vmatpush1.bf16.msra.mxu0 %v389
    %430 = vmatprep.subr.bf16.mxu0 0
    %431 = vmatpush1.bf16.msra.mxu0 %v390
    %432 = vmatprep.subr.bf16.mxu0 0
    %433 = vmatpush1.bf16.msra.mxu0 %v391
    %434 = vmatprep.subr.bf16.mxu0 0
    %435 = vmatpush1.bf16.msra.mxu0 %v392
    %436 = vmatprep.subr.bf16.mxu0 0
    %437 = vmatpush1.bf16.msra.mxu0 %v393
    %438 = vmatprep.subr.bf16.mxu0 0
    %439 = vmatpush1.bf16.msra.mxu0 %v394
    %440 = vmatprep.subr.bf16.mxu0 0
    %441 = vmatpush1.bf16.msra.mxu0 %v395
    %442 = vmatprep.subr.bf16.mxu0 0
    %443 = vmatpush1.bf16.msra.mxu0 %v396
    %444 = vmatprep.subr.bf16.mxu0 0
    %445 = vmatpush1.bf16.msra.mxu0 %v397
    %446 = vmatprep.mubr.bf16.mxu0 %v278
    %447 = vmatmul.mubr.bf16.gmra.mrb[0].mxu0 %v277
    %v448 = vpop.f32.mrb[0].mxu0
    %v449 = vadd.f32 %v316, %v448
    %v450 = vpop.f32.mrb[0].mxu0
    %v451 = vpop.f32.mrb[0].mxu0
    %v452 = vpop.f32.mrb[0].mxu0
    %453 = vdwg.mxu0
    %v454 = vmax.f32 %v449, 0.0
    %v455 = vpack.c.bf16 %v454, %v454
    %v456 = vld [vmem:[#allocation12] sm:$0xf]
    %v457 = vld [vmem:[#allocation12 + $0x4] sm:$0xf]
    %v458 = vld [vmem:[#allocation12 + $0x8] sm:$0xf]
    %v459 = vld [vmem:[#allocation12 + $0xc] sm:$0xf]
    %v460 = vld [vmem:[#allocation12 + $0x10] sm:$0xf]
    %v461 = vld [vmem:[#allocation12 + $0x14] sm:$0xf]
    %v462 = vld [vmem:[#allocation12 + $0x18] sm:$0xf]
    %v463 = vld [vmem:[#allocation12 + $0x1c] sm:$0xf]
    %v464 = vld [vmem:[#allocation12 + $0x20] sm:$0xf]
    %v465 = vld [vmem:[#allocation12 + $0x24] sm:$0xf]
    %v466 = vld [vmem:[#allocation12 + $0x28] sm:$0xf]
    %v467 = vld [vmem:[#allocation12 + $0x2c] sm:$0xf]
    %v468 = vld [vmem:[#allocation12 + $0x30] sm:$0xf]
    %v469 = vld [vmem:[#allocation12 + $0x34] sm:$0xf]
    %v470 = vld [vmem:[#allocation12 + $0x38] sm:$0xf]
    %v471 = vld [vmem:[#allocation12 + $0x3c] sm:$0xf]
    %v472 = vld [vmem:[%s8] sm:$0x1]
    %v474 = vlaneseq
    %v475 = vshrl.u32 %v474, 7
    %v476 = vsub.s32 0, %v475
    %v477 = vrot.slane %v472, %v476
    %v495 = vunpack.c.l.b16 %v456
    %v496 = vunpack.c.l.b16 %v457
    %v497 = vunpack.c.l.b16 %v458
    %v498 = vunpack.c.l.b16 %v459
    %v499 = vunpack.c.l.b16 %v460
    %v500 = vunpack.c.l.b16 %v461
    %v501 = vunpack.c.l.b16 %v462
    %v502 = vunpack.c.l.b16 %v463
    %v503 = vunpack.c.l.b16 %v464
    %v504 = vunpack.c.l.b16 %v465
    %v505 = vunpack.c.l.b16 %v466
    %v506 = vunpack.c.l.b16 %v467
    %v507 = vunpack.c.l.b16 %v468
    %v508 = vunpack.c.l.b16 %v469
    %v509 = vunpack.c.l.b16 %v470
    %v510 = vunpack.c.l.b16 %v471
    %v511 = vpack.c.b16 %v496, %v495
    %v512 = vpack.c.b16 %v498, %v497
    %v513 = vpack.c.b16 %v500, %v499
    %v514 = vpack.c.b16 %v502, %v501
    %v515 = vpack.c.b16 %v504, %v503
    %v516 = vpack.c.b16 %v506, %v505
    %v517 = vpack.c.b16 %v508, %v507
    %v518 = vpack.c.b16 %v510, %v509
    %527 = vmatprep.subr.bf16.mxu0 0
    %528 = vmatpush1.bf16.msra.mxu0 %v511
    %529 = vmatprep.subr.bf16.mxu0 0
    %530 = vmatpush1.bf16.msra.mxu0 %v512
    %531 = vmatprep.subr.bf16.mxu0 0
    %532 = vmatpush1.bf16.msra.mxu0 %v513
    %533 = vmatprep.subr.bf16.mxu0 0
    %534 = vmatpush1.bf16.msra.mxu0 %v514
    %535 = vmatprep.subr.bf16.mxu0 0
    %536 = vmatpush1.bf16.msra.mxu0 %v515
    %537 = vmatprep.subr.bf16.mxu0 0
    %538 = vmatpush1.bf16.msra.mxu0 %v516
    %539 = vmatprep.subr.bf16.mxu0 0
    %540 = vmatpush1.bf16.msra.mxu0 %v517
    %541 = vmatprep.subr.bf16.mxu0 0
    %542 = vmatpush1.bf16.msra.mxu0 %v518
    %543 = vmatprep.subr.bf16.mxu0 0
    %544 = vmatpush1.bf16.msra.mxu0 0
    %545 = vmatprep.subr.bf16.mxu0 0
    %546 = vmatpush1.bf16.msra.mxu0 0
    %547 = vmatprep.subr.bf16.mxu0 0
    %548 = vmatpush1.bf16.msra.mxu0 0
    %549 = vmatprep.subr.bf16.mxu0 0
    %550 = vmatpush1.bf16.msra.mxu0 0
    %551 = vmatprep.subr.bf16.mxu0 0
    %552 = vmatpush1.bf16.msra.mxu0 0
    %553 = vmatprep.subr.bf16.mxu0 0
    %554 = vmatpush1.bf16.msra.mxu0 0
    %555 = vmatprep.subr.bf16.mxu0 0
    %556 = vmatpush1.bf16.msra.mxu0 0
    %557 = vmatprep.subr.bf16.mxu0 0
    %558 = vmatpush1.bf16.msra.mxu0 0
    %559 = vmatprep.mubr.bf16.mxu0 0
    %560 = vmatmul.mubr.bf16.gmra.mrb[0].mxu0 %v455
    %v561 = vpop.f32.mrb[0].mxu0
    %v562 = vadd.f32 %v477, %v561
    %v563 = vpop.f32.mrb[0].mxu0
    %v564 = vpop.f32.mrb[0].mxu0
    %v565 = vpop.f32.mrb[0].mxu0
    %566 = vdwg.mxu0
    %v567 = vmax.f32 %v562, 0.0
    %v568 = vld [vmem:[%s9] sm:$0x1]
    %v569 = vpack.c.bf16 %v567, %v567
    %v570 = vld [vmem:[#allocation2] sm:$0x1]
    %572 = vset.pattern.permute.xlu0 0
    %573 = vperm.xlu0 %572, %v570
    %v574 = vpop.permute.xlu0 %573
    %v576 = vlaneseq
    %v577 = vshrl.u32 %v576, 7
    %v578 = vsub.s32 0, %v577
    %v579 = vrot.slane %v574, %v578
    %580 = vmatprep.subr.bf16.mxu0 0
    %581 = vmatpush1.bf16.xpose.msra.mxu0 %v569
    %582 = vmatprep.subr.bf16.mxu0 0
    %583 = vmatpush1.bf16.xpose.msra.mxu0 0
    %584 = vmatprep.subr.bf16.mxu0 0
    %585 = vmatpush1.bf16.xpose.msra.mxu0 0
    %586 = vmatprep.subr.bf16.mxu0 0
    %587 = vmatpush1.bf16.xpose.msra.mxu0 0
    %588 = vmatprep.subr.bf16.mxu0 0
    %589 = vmatpush1.bf16.xpose.msra.mxu0 0
    %590 = vmatprep.subr.bf16.mxu0 0
    %591 = vmatpush1.bf16.xpose.msra.mxu0 0
    %592 = vmatprep.subr.bf16.mxu0 0
    %593 = vmatpush1.bf16.xpose.msra.mxu0 0
    %594 = vmatprep.subr.bf16.mxu0 0
    %595 = vmatpush1.bf16.xpose.msra.mxu0 0
    %596 = vmatprep.subr.bf16.mxu0 0
    %597 = vmatpush1.bf16.xpose.msra.mxu0 0
    %598 = vmatprep.subr.bf16.mxu0 0
    %599 = vmatpush1.bf16.xpose.msra.mxu0 0
    %600 = vmatprep.subr.bf16.mxu0 0
    %601 = vmatpush1.bf16.xpose.msra.mxu0 0
    %602 = vmatprep.subr.bf16.mxu0 0
    %603 = vmatpush1.bf16.xpose.msra.mxu0 0
    %604 = vmatprep.subr.bf16.mxu0 0
    %605 = vmatpush1.bf16.xpose.msra.mxu0 0
    %606 = vmatprep.subr.bf16.mxu0 0
    %607 = vmatpush1.bf16.xpose.msra.mxu0 0
    %608 = vmatprep.subr.bf16.mxu0 0
    %609 = vmatpush1.bf16.xpose.msra.mxu0 0
    %610 = vmatprep.subr.bf16.mxu0 0
    %611 = vmatpush1.bf16.xpose.msra.mxu0 0
    %612 = vmatprep.mubr.bf16.mxu0 0
    %613 = vmatmul.mubr.bf16.gmra.mrb[0].mxu0 %v568
    %v614 = vpop.f32.mrb[0].mxu0
    %v615 = vadd.f32 %v579, %v614
    %v616 = vpop.f32.mrb[0].mxu0
    %v617 = vpop.f32.mrb[0].mxu0
    %v618 = vpop.f32.mrb[0].mxu0
    %619 = vdwg.mxu0
    %vm620 = vcmask 57344
    %621 = vst.msk [vmem:[#allocation14] sm:$0x1] %vm620, %v615
    // Predicated region
    $region70: #{tpu_custom_call.1} parent=1 // pred_check
      _
    $region71: #{tpu_custom_call.1} parent=1 // pred_check_branch
      %623 = sbr.rel (0) target = $region73
    $region72: #{tpu_custom_call.1} parent=1 // pred_region
      %s625 = ssub.s32 16, 16
      %626 = vsyncadd [#allocation5], %s625
      %s628 = sshll.u32 [#allocation14], 4
      %s629 = int_to_ptr.vmem [resolvable:$true] %s628
      %631 = dma.vmem_to_hbm [thread:$0]  %s629, 16, %s11, [#allocation5]
    $region73: #{tpu_custom_call.1} parent=1 // pred_fallthru
      _
    // Predicated region
    $region74: #{tpu_custom_call.1} parent=1 // pred_check
      _
    $region75: #{tpu_custom_call.1} parent=1 // pred_check_branch
      %633 = sbr.rel (0) target = $region77
    $region76: #{tpu_custom_call.1} parent=1 // pred_region
      %634 = dma.done [#allocation5], 16
    $region77: #{tpu_custom_call.1} parent=1 // pred_fallthru
      _
    %635 = vsyncpa [#allocation4], 1
    %636 = vsyncpa [#allocation7], 1
    %637 = vsyncpa [#allocation10], 1
    %638 = vsyncpa [#allocation13], 1
    %639 = vsyncpa [#allocation5], 1

</llo_original>
